<compile_context>
chip_gen: v5e
topology: v5e:2x2
jax: 0.10.0
libtpu: 0.0.40
codegen_flags: <defaults>
</compile_context>

<pallas_src>
import math

import jax
import jax.numpy as jnp
from jax.experimental import pallas as pl
from jax.experimental.pallas import tpu as pltpu

_LANES = 128


def _scalable_tanh_kernel(x_ref, scale_ref, o_ref):
    # Upcast to f32 for the EUP tanh (safe on all generations; kernel is
    # HBM-bound so the extra vreg pressure is free), broadcast-multiply by the
    # (1, block_cols) scale row, cast back to the I/O dtype for the store.
    x = x_ref[...].astype(jnp.float32)
    s = scale_ref[...].astype(jnp.float32)
    o_ref[...] = (s * jnp.tanh(x)).astype(o_ref.dtype)


def _min_sublane_rows(itemsize: int) -> int:
    # Packed sublane tiling: f32 -> 8 rows, bf16 -> 16, int8/fp8 -> 32.
    return 8 * (4 // itemsize) if itemsize <= 4 else 8


def _tpu_tile_config():
    """Return (tile_budget_bytes, vmem_limit_bytes or None) per TPU generation."""
    kind = ""
    try:
        kind = jax.devices()[0].device_kind.lower()
    except Exception:
        pass

    if ("v5 lite" in kind) or ("v5e" in kind) or ("v5lite" in kind):
        # v5e: 0.82 TB/s, 16 MiB default scoped VMEM.  2 MiB tiles already put
        # per-step overhead at ~7%; bigger tiles would blow the scoped limit.
        budget, limit = 2 << 20, None
    elif "v6" in kind:
        # v6e: 1.4 TB/s.  4 MiB tiles amortize the ~0.35 us per-step overhead.
        budget, limit = 4 << 20, 48 << 20
    elif "7" in kind:
        # v7x: 3.2 TB/s per TC.  8 MiB tiles keep step overhead <5%; the raised
        # scoped limit covers double-buffered in+out (~32.5 MiB < 64 MiB VMEM).
        budget, limit = 8 << 20, 48 << 20
    else:
        # Unknown / future chip: moderate tiles, conservatively raised limit.
        budget, limit = 4 << 20, 48 << 20

    # Clamp the scoped limit against the actual VMEM capacity when queryable.
    try:
        cap = getattr(pltpu.get_tpu_info(), "vmem_capacity_bytes", None)
        if cap and limit:
            limit = min(limit, int(cap) * 3 // 4)
    except Exception:
        pass
    return budget, limit


def _choose_block(m: int, f: int, itemsize: int, tile_budget_bytes: int):
    """Pick (block_rows, block_cols) for an (m, f) lane-dense array."""
    min_rows = _min_sublane_rows(itemsize)

    if f % _LANES == 0:
        max_cols = max(
            _LANES,
            (tile_budget_bytes // (min_rows * itemsize)) // _LANES * _LANES)
        block_cols = min(f, max_cols)
    else:
        block_cols = f  # full-extent feature block (always legal) -- fallback only

    block_rows = max(min_rows, tile_budget_bytes // (block_cols * itemsize))
    block_rows = (block_rows // min_rows) * min_rows

    # Megacore (v7x has 2 TensorCores): when the feature axis is not
    # column-blocked and the array is big enough to be worth splitting, cap
    # block_rows so the leading "parallel" axis gets at least 2 grid steps.
    # Harmless (one extra tiny step) on single-core chips.
    if block_cols == f and m * f * itemsize >= (1 << 20):
        half_rows = ((m + 1) // 2 + min_rows - 1) // min_rows * min_rows
        block_rows = min(block_rows, max(min_rows, half_rows))

    if block_rows >= m:
        block_rows = m  # full-extent row block (always legal)
    return block_rows, block_cols


def scalable_tanh(x: jax.Array, scale: jax.Array) -> jax.Array:
    """scale * tanh(x); `scale` (F,) broadcast over all leading axes of x."""
    orig_shape = x.shape
    F = orig_shape[-1]
    assert scale.shape == (F,), "scale must be (input_size,)"

    x2 = x.reshape(-1, F)  # PyTorch broadcasts scale over all leading dims
    M = x2.shape[0]
    itemsize = jnp.dtype(x.dtype).itemsize
    tile_budget, vmem_limit = _tpu_tile_config()

    # ---- Lane-dense layout plumbing (wrapper-side, kernel body unchanged) ----
    repacked = False
    pad_cols = 0
    if F % _LANES == 0:
        xk, scale_k, M2, F2 = x2, scale, M, F
    else:
        rows_per = _LANES // math.gcd(F, _LANES)       # rows folded per lane-dense row
        m_pad = pl.cdiv(M, rows_per) * rows_per
        f_pad = pl.cdiv(F, _LANES) * _LANES
        if m_pad * F <= M * f_pad:
            # Fold `rows_per` rows into one lane-dense row (pad the row axis if
            # needed); scale is tiled to match.  Zero-copy reshape when no pad.
            if m_pad != M:
                x2 = jnp.pad(x2, ((0, m_pad - M), (0, 0)))
            M2, F2 = m_pad // rows_per, F * rows_per
            xk = x2.reshape(M2, F2)
            scale_k = jnp.tile(scale, rows_per)
            repacked = True
        else:
            # Pad the feature axis up to the next multiple of 128.
            pad_cols = f_pad - F
            xk = jnp.pad(x2, ((0, 0), (0, pad_cols)))
            scale_k = jnp.pad(scale, (0, pad_cols))
            M2, F2 = M, f_pad

    block_rows, block_cols = _choose_block(M2, F2, itemsize, tile_budget)
    n_rows = pl.cdiv(M2, block_rows)
    n_cols = pl.cdiv(F2, block_cols)

    scale2d = scale_k.reshape(1, F2)

    cost = pl.CostEstimate(
        flops=M2 * F2,
        transcendentals=M2 * F2,
        bytes_accessed=(2 * M2 * F2 * itemsize
                        + F2 * jnp.dtype(scale.dtype).itemsize),
    )
    compiler_params = pltpu.CompilerParams(
        dimension_semantics=("parallel", "parallel"),
        vmem_limit_bytes=vmem_limit,
    )

    if n_cols > 1:
        # Column index outermost: the scale tile's block index is constant
        # across the inner row loop (no per-step re-DMA of scale), and the
        # leading parallel axis has >= 2 steps for megacore sharding.
        grid = (n_cols, n_rows)
        x_spec = pl.BlockSpec((block_rows, block_cols), lambda j, i: (i, j))
        s_spec = pl.BlockSpec((1, block_cols), lambda j, i: (0, j))
        o_spec = pl.BlockSpec((block_rows, block_cols), lambda j, i: (i, j))
    else:
        grid = (n_rows, n_cols)
        x_spec = pl.BlockSpec((block_rows, block_cols), lambda i, j: (i, j))
        s_spec = pl.BlockSpec((1, block_cols), lambda i, j: (0, j))
        o_spec = pl.BlockSpec((block_rows, block_cols), lambda i, j: (i, j))

    out2 = pl.pallas_call(
        _scalable_tanh_kernel,
        out_shape=jax.ShapeDtypeStruct((M2, F2), x.dtype),
        grid_spec=pltpu.PrefetchScalarGridSpec(
            num_scalar_prefetch=0,
            grid=grid,
            in_specs=[x_spec, s_spec],
            out_specs=o_spec,
        ),
        compiler_params=compiler_params,
        cost_estimate=cost,
    )(xk, scale2d)

    # ---- Undo the layout plumbing --------------------------------------------
    if F % _LANES == 0:
        out = out2
    elif repacked:
        out = out2.reshape(-1, F)[:M]
    else:
        out = out2[:, :F]
    return out.reshape(orig_shape)


if __name__ == "__main__":
    key = jax.random.PRNGKey(0)
    kx, ks, kx2 = jax.random.split(key, 3)

    # Small shapes consistent with the module: (batch, input_size).
    batch, input_size = 16, 32
    x = jax.random.normal(kx, (batch, input_size), dtype=jnp.float32)
    # PyTorch initializes scale to zeros; use a non-zero init to exercise the math.
    scale = jax.random.normal(ks, (input_size,), dtype=jnp.float32)

    out = jax.block_until_ready(scalable_tanh(x, scale))
    ref = scale[None, :] * jnp.tanh(x)
    assert out.shape == ref.shape and out.dtype == ref.dtype
    assert jnp.allclose(out, ref, atol=1e-6, rtol=1e-6), "f32 mismatch vs reference"

    # Faithful zero-init case (matches PyTorch __init__).
    out_zero = jax.block_until_ready(
        scalable_tanh(x, jnp.zeros((input_size,), jnp.float32)))
    assert jnp.all(out_zero == 0.0)

    # Odd feature dim / row-padded repack path (M=10, F=48).
    x_odd = jax.random.normal(kx2, (10, 48), dtype=jnp.float32)
    s_odd = jnp.linspace(-1.0, 1.0, 48, dtype=jnp.float32)
    out_odd = jax.block_until_ready(scalable_tanh(x_odd, s_odd))
    ref_odd = s_odd[None, :] * jnp.tanh(x_odd)
    assert jnp.allclose(out_odd, ref_odd, atol=1e-6, rtol=1e-6), "repack-pad mismatch"

    # Mixed-dtype path: bf16 activations with f32 scale (cast on store).
    x_bf = x.astype(jnp.bfloat16)
    out_bf = jax.block_until_ready(scalable_tanh(x_bf, scale))
    ref_bf = (scale[None, :] * jnp.tanh(x_bf.astype(jnp.float32))).astype(jnp.bfloat16)
    assert out_bf.dtype == jnp.bfloat16
    assert jnp.allclose(out_bf.astype(jnp.float32), ref_bf.astype(jnp.float32),
                        atol=2e-2, rtol=2e-2), "bf16 mismatch vs reference"

    print("KERNEL_OK")
</pallas_src>

<mosaic_0001>
module attributes {stable_mosaic.version = 11 : i64} {
  func.func @_scalable_tanh_kernel(%arg0: i32, %arg1: i32, %arg2: memref<4x128xf32, #tpu.memory_space<vmem>>, %arg3: memref<1x128xf32, #tpu.memory_space<vmem>>, %arg4: memref<4x128xf32, #tpu.memory_space<vmem>>) attributes {dimension_semantics = [#tpu.dimension_semantics<parallel>, #tpu.dimension_semantics<parallel>], iteration_bounds = array<i64: 1, 1>, scalar_prefetch = 0 : i64, scratch_operands = 0 : i64, tpu.core_type = #tpu.core_type<tc>, window_params = [{transform_indices = @transform_0, window_bounds = array<i64: 4, 128>}, {transform_indices = @transform_1, window_bounds = array<i64: 1, 128>}, {transform_indices = @transform_2, window_bounds = array<i64: 4, 128>}]} {
    %c0 = arith.constant 0 : index
    %c0_0 = arith.constant 0 : index
    %0 = vector.load %arg2[%c0, %c0_0] : memref<4x128xf32, #tpu.memory_space<vmem>>, vector<4x128xf32>
    %c0_1 = arith.constant 0 : index
    %c0_2 = arith.constant 0 : index
    %1 = vector.load %arg3[%c0_1, %c0_2] : memref<1x128xf32, #tpu.memory_space<vmem>>, vector<1x128xf32>
    %2 = math.tanh %0 : vector<4x128xf32>
    %3 = vector.broadcast %1 : vector<1x128xf32> to vector<4x128xf32>
    %4 = arith.mulf %3, %2 : vector<4x128xf32>
    %c0_3 = arith.constant 0 : index
    %c0_4 = arith.constant 0 : index
    %5 = vector.load %arg4[%c0_3, %c0_4] : memref<4x128xf32, #tpu.memory_space<vmem>>, vector<4x128xf32>
    tpu.vector_store %arg4[%c0_3, %c0_4], %4 {strides = array<i32>} : memref<4x128xf32, #tpu.memory_space<vmem>>, vector<4x128xf32>,
    return
  }
  func.func @transform_0(%arg0: i32, %arg1: i32) -> (i32, i32) {
    %c0_i32 = arith.constant 0 : i32
    return %arg0, %arg1 : i32, i32
  }
  func.func @transform_1(%arg0: i32, %arg1: i32) -> (i32, i32) {
    %c0_i32 = arith.constant 0 : i32
    %c0_i32_0 = arith.constant 0 : i32
    return %c0_i32, %arg1 : i32, i32
  }
  func.func @transform_2(%arg0: i32, %arg1: i32) -> (i32, i32) {
    %c0_i32 = arith.constant 0 : i32
    return %arg0, %arg1 : i32, i32
  }
}

</mosaic_0001>

<llo_original>
// kernel: tpu_custom_call.1
$region0: #{tpu_custom_call.1}
  #allocation0 [shape = 'u32[]', space=smem, size = 0x4, offset = 0x4, fixed_abs, tag = 'smem constant byte address 0x4 - core index']
  #allocation1 [shape = 'u32[72,128]{1,0:T(1,128)}', space=vmem, size = 0x9000, scoped, tag = 'internal scratch']
  %s0 = inlined_call_operand.hbm [shape: f32[4,128], index: 0, kind: input, shape index: {}]
  %s1 = inlined_call_operand.hbm [shape: f32[1,128], index: 1, kind: input, shape index: {}]
  %s2 = inlined_call_operand.hbm [shape: f32[4,128], index: 2, kind: output, shape index: {}]
  %s3 = sld [smem:[#allocation0]]
  $region26: #{tpu_custom_call.1} parent=0
    _
  %s5 = ssub.s32 1, %s3
  %s6 = scalar_select 0, %s5, %s3
  $region1: #{tpu_custom_call.1} parent=0
    #allocation2 [shape = 'u8[2048]{0}', space=vmem, size = 0x800, scoped, tag = 'input window, operand 0, single buffered']
    #allocation3 [shape = 's32[1]{0}', space=sflag, size = 0x4, scoped, tag = 'scoped memory for tpu_custom_call.1']
    #allocation4 [shape = 's32[1]{0}', space=sflag, size = 0x4, scoped, tag = 'scoped memory for tpu_custom_call.1']
    #allocation5 [shape = 'u8[512]{0}', space=vmem, size = 0x400, scoped, tag = 'input window, operand 1, single buffered']
    #allocation6 [shape = 's32[1]{0}', space=sflag, size = 0x4, scoped, tag = 'scoped memory for tpu_custom_call.1']
    #allocation7 [shape = 'u8[2048]{0}', space=vmem, size = 0x800, scoped, tag = 'output window, operand 0, single buffered']
    %7 = vsyncpa [#allocation3], 0
    %8 = vsyncpa [#allocation6], 0
    %9 = vsyncpa [#allocation4], 0
    // Predicated region
    $region2: #{tpu_custom_call.1} parent=1 // pred_check
      _
    $region3: #{tpu_custom_call.1} parent=1 // pred_check_branch
      %11 = sbr.rel (0) target = $region5
    $region4: #{tpu_custom_call.1} parent=1 // pred_region
      %13 = vsyncadd [#allocation3], 0
      %s15 = sshll.u32 %s0, 4
      %s16 = int_to_ptr.hbm [resolvable:$true] %s15
      %s17 = sshll.u32 [#allocation2], 4
      %s18 = int_to_ptr.vmem [resolvable:$true] %s17
      %20 = dma.hbm_to_vmem [thread:$0]  %s16, 64, %s18, [#allocation3]
    $region5: #{tpu_custom_call.1} parent=1 // pred_fallthru
      _
    // Predicated region
    $region6: #{tpu_custom_call.1} parent=1 // pred_check
      _
    $region7: #{tpu_custom_call.1} parent=1 // pred_check_branch
      %22 = sbr.rel (0) target = $region9
    $region8: #{tpu_custom_call.1} parent=1 // pred_region
      %24 = vsyncadd [#allocation6], 0
      %s26 = sshll.u32 %s1, 4
      %s27 = int_to_ptr.hbm [resolvable:$true] %s26
      %s28 = sshll.u32 [#allocation5], 4
      %s29 = int_to_ptr.vmem [resolvable:$true] %s28
      %31 = dma.hbm_to_vmem [thread:$0]  %s27, 16, %s29, [#allocation6]
    $region9: #{tpu_custom_call.1} parent=1 // pred_fallthru
      _
    // Predicated region
    $region10: #{tpu_custom_call.1} parent=1 // pred_check
      _
    $region11: #{tpu_custom_call.1} parent=1 // pred_check_branch
      %33 = sbr.rel (0) target = $region13
    $region12: #{tpu_custom_call.1} parent=1 // pred_region
      %35 = dma.done [#allocation3], 64
    $region13: #{tpu_custom_call.1} parent=1 // pred_fallthru
      _
    // Predicated region
    $region14: #{tpu_custom_call.1} parent=1 // pred_check
      _
    $region15: #{tpu_custom_call.1} parent=1 // pred_check_branch
      %37 = sbr.rel (0) target = $region17
    $region16: #{tpu_custom_call.1} parent=1 // pred_region
      %39 = dma.done [#allocation6], 16
    $region17: #{tpu_custom_call.1} parent=1 // pred_fallthru
      _
    %v40 = vld [vmem:[#allocation2] sm:$0xf]
    %v41 = vld [vmem:[#allocation5] sm:$0x1]
    %v42 = vtanh.pop %v40
    %v44 = vperm.slane %v41, 0
    %v46 = vmul.f32 %v44, %v42
    %47 = vst [vmem:[#allocation7] sm:$0xf] %v46
    // Predicated region
    $region18: #{tpu_custom_call.1} parent=1 // pred_check
      _
    $region19: #{tpu_custom_call.1} parent=1 // pred_check_branch
      %49 = sbr.rel (0) target = $region21
    $region20: #{tpu_custom_call.1} parent=1 // pred_region
      %51 = vsyncadd [#allocation4], 0
      %s53 = sshll.u32 [#allocation7], 4
      %s54 = int_to_ptr.vmem [resolvable:$true] %s53
      %s55 = sshll.u32 %s2, 4
      %s56 = int_to_ptr.hbm [resolvable:$true] %s55
      %58 = dma.vmem_to_hbm [thread:$0]  %s54, 64, %s56, [#allocation4]
    $region21: #{tpu_custom_call.1} parent=1 // pred_fallthru
      _
    // Predicated region
    $region22: #{tpu_custom_call.1} parent=1 // pred_check
      _
    $region23: #{tpu_custom_call.1} parent=1 // pred_check_branch
      %60 = sbr.rel (0) target = $region25
    $region24: #{tpu_custom_call.1} parent=1 // pred_region
      %62 = dma.done [#allocation4], 64
    $region25: #{tpu_custom_call.1} parent=1 // pred_fallthru
      _
    %63 = vsyncpa [#allocation3], 1
    %64 = vsyncpa [#allocation6], 1
    %65 = vsyncpa [#allocation4], 1

</llo_original>
